<compile_context>
chip_gen: v7x
topology: tpu7x:2x2x1
jax: 0.10.0
libtpu: 0.0.40
codegen_flags: <defaults>
</compile_context>

<pallas_src>
import jax
import jax.numpy as jnp
from jax.experimental import pallas as pl
from jax.experimental.pallas import tpu as pltpu


def _round_up(v, m):
    return (v + m - 1) // m * m


def _cdiv(a, b):
    return (a + b - 1) // b


def _make_kernel(num_lc):
    """Kernel body.  Ref order:
       x_ref, w1_ref, b1_ref, [wbd_0, b_0, ..., wbd_{L-1}, b_{L-1}], out_ref
    """
    def kernel(*refs):
        x_ref, w1_ref, b1_ref = refs[:3]
        lc_refs = refs[3:3 + 2 * num_lc]
        out_ref = refs[3 + 2 * num_lc]

        # Fused fc1_pos - fc1_neg: single MXU matmul, f32 accumulation.
        h = jnp.dot(x_ref[...], w1_ref[...],
                    preferred_element_type=jnp.float32) + b1_ref[...]

        # Each LocallyConnected layer == one block-diagonal matmul on the
        # lane-dense [tile_n, d*m_in (padded)] activation.
        for l in range(num_lc):
            w_ref = lc_refs[2 * l]
            b_ref = lc_refs[2 * l + 1]
            a = jax.nn.sigmoid(h)                       # one EUP pass, f32
            h = jnp.dot(a.astype(w_ref.dtype), w_ref[...],
                        preferred_element_type=jnp.float32) + b_ref[...]

        out_ref[...] = h.astype(out_ref.dtype)

    return kernel


def notears_mlp_forward(x, params, dims, *, compute_dtype=jnp.float32,
                        max_tile_n=256):
    """Forward pass matching NotearsMLP.forward (requires dims[-1] == 1)."""
    assert len(dims) >= 2 and dims[-1] == 1
    d, m1 = dims[0], dims[1]
    num_lc = len(dims) - 2
    n = x.shape[0]
    w1p, b1p, w1n, b1n, lc = params

    # ---------- wrapper-side parameter preparation (plain-JAX glue) ----------
    # (1) fuse fc1_pos - fc1_neg into a single affine map, pad to 128 lanes.
    h1 = d * m1
    h1_pad = _round_up(h1, 128)
    w1 = jnp.pad((w1p - w1n).T, ((0, 0), (0, h1_pad - h1)))       # [d, h1_pad]
    b1 = jnp.pad(b1p - b1n, (0, h1_pad - h1)).reshape(1, h1_pad)

    # (2) each LocallyConnected layer -> one padded block-diagonal matrix.
    lc_mats = []
    cur_pad = h1_pad
    for li, (w, b) in enumerate(lc):
        m_in, m_out = dims[li + 1], dims[li + 2]
        in_pad = _round_up(d * m_in, 128)
        out_pad = _round_up(d * m_out, 128)
        eye = jnp.eye(d, dtype=w.dtype)
        wbd = jnp.einsum('jk,jmo->jmko', eye, w).reshape(d * m_in, d * m_out)
        wbd = jnp.pad(wbd, ((0, in_pad - d * m_in), (0, out_pad - d * m_out)))
        bflat = jnp.pad(b.reshape(d * m_out), (0, out_pad - d * m_out))
        lc_mats.append((wbd, bflat.reshape(1, out_pad)))
        cur_pad = out_pad
    out_pad_width = cur_pad
    d_out = d * dims[-1]                      # logical output width (== d)

    # ---------- batch tiling ----------
    # Pick the number of grid steps first, then the smallest 8-aligned tile
    # that covers the batch, so padded-row waste is minimal (vs. rounding the
    # whole batch up to a fixed 256-row tile).
    n_eff = max(n, 1)
    num_tiles = _cdiv(n_eff, max_tile_n)
    tile_n = _round_up(_cdiv(n_eff, num_tiles), 8)
    n_pad = tile_n * num_tiles
    x_p = jnp.pad(x, ((0, n_pad - n), (0, 0)))

    inputs = [x_p.astype(compute_dtype),
              w1.astype(compute_dtype),
              b1.astype(jnp.float32)]
    for wbd, bflat in lc_mats:
        inputs.append(wbd.astype(compute_dtype))      # MXU operand
        inputs.append(bflat.astype(jnp.float32))      # bias add stays f32

    # x / out tiled over the batch; weights/biases VMEM-resident (constant
    # block index across the grid -> no re-DMA between steps).
    def resident(a):
        return pl.BlockSpec(a.shape, lambda i: (0, 0))

    in_specs = [pl.BlockSpec((tile_n, d), lambda i: (i, 0))]
    in_specs += [resident(a) for a in inputs[1:]]
    out_specs = pl.BlockSpec((tile_n, out_pad_width), lambda i: (i, 0))

    out_full = pl.pallas_call(
        _make_kernel(num_lc),
        out_shape=jax.ShapeDtypeStruct((n_pad, out_pad_width), jnp.float32),
        grid=(num_tiles,),
        in_specs=in_specs,
        out_specs=out_specs,
        compiler_params=pltpu.CompilerParams(
            # Batch axis is embarrassingly parallel -> both TCs on v7x.
            dimension_semantics=("parallel",),
            # Tiles + resident weights fit comfortably; 32 MiB is within the
            # scoped-VMEM budget of every generation (incl. v7x's 64 MiB phys).
            vmem_limit_bytes=32 * 1024 * 1024,
        ),
    )(*inputs)

    # Drop batch padding and lane padding; dims[-1]==1 => shape [n, d].
    return out_full[:n, :d_out]


def notears_mlp_reference(x, params, dims):
    """Pure-JAX reference matching the PyTorch forward exactly."""
    d, m1 = dims[0], dims[1]
    w1p, b1p, w1n, b1n, lc = params
    h = (x @ w1p.T + b1p) - (x @ w1n.T + b1n)       # fc1_pos(x) - fc1_neg(x)
    h = h.reshape(-1, d, m1)
    for (w, b) in lc:
        h = jax.nn.sigmoid(h)
        h = jnp.einsum('njm,jmk->njk', h, w) + b[None, :, :]
    return h[..., 0]                                 # squeeze(dim=2)


def init_params(key, dims):
    """Deterministic synthetic parameters with the module's shapes."""
    d, m1 = dims[0], dims[1]
    num_lc = len(dims) - 2
    keys = jax.random.split(key, 4 + 2 * num_lc)
    w1p = 0.1 * jax.random.normal(keys[0], (d * m1, d), jnp.float32)
    w1n = 0.1 * jax.random.normal(keys[1], (d * m1, d), jnp.float32)
    b1p = 0.1 * jax.random.normal(keys[2], (d * m1,), jnp.float32)
    b1n = 0.1 * jax.random.normal(keys[3], (d * m1,), jnp.float32)
    lc = []
    ki = 4
    for layer in range(num_lc):
        m_in, m_out = dims[layer + 1], dims[layer + 2]
        w = 0.1 * jax.random.normal(keys[ki], (d, m_in, m_out), jnp.float32)
        ki += 1
        b = 0.1 * jax.random.normal(keys[ki], (d, m_out), jnp.float32)
        ki += 1
        lc.append((w, b))
    return w1p, b1p, w1n, b1n, lc


if __name__ == "__main__":
    key = jax.random.PRNGKey(0)

    configs = [
        ([8, 16, 1], 300),     # d*m1 = 128 (lane-aligned), 1 LC layer, ragged batch
        ([6, 16, 8, 1], 100),  # unaligned widths (96/48/6 -> padded), 2 LC layers
    ]
    for dims, n in configs:
        kx, kp, key = jax.random.split(key, 3)
        x = jax.random.normal(kx, (n, dims[0]), jnp.float32)
        params = init_params(kp, dims)

        out = jax.block_until_ready(notears_mlp_forward(x, params, dims))
        ref = notears_mlp_reference(x, params, dims)
        assert out.shape == (n, dims[0]), (out.shape, dims)
        assert jnp.allclose(out, ref, atol=1e-5, rtol=1e-5)

        # bf16 MXU operands with f32 accumulation (looser tolerance).
        out_bf16 = jax.block_until_ready(
            notears_mlp_forward(x, params, dims, compute_dtype=jnp.bfloat16))
        assert out_bf16.shape == (n, dims[0])
        assert jnp.allclose(out_bf16, ref, atol=5e-2, rtol=5e-2)

    print("KERNEL_OK")
</pallas_src>

<mosaic_0001>
module attributes {stable_mosaic.version = 11 : i64} {
  func.func @kernel(%arg0: i32, %arg1: memref<152x8xf32, #tpu.memory_space<vmem>>, %arg2: memref<8x128xf32, #tpu.memory_space<vmem>>, %arg3: memref<1x128xf32, #tpu.memory_space<vmem>>, %arg4: memref<128x128xf32, #tpu.memory_space<vmem>>, %arg5: memref<1x128xf32, #tpu.memory_space<vmem>>, %arg6: memref<152x128xf32, #tpu.memory_space<vmem>>) attributes {dimension_semantics = [#tpu.dimension_semantics<parallel>], iteration_bounds = array<i64: 2>, scalar_prefetch = 0 : i64, scratch_operands = 0 : i64, tpu.core_type = #tpu.core_type<tc>, window_params = [{transform_indices = @transform_0, window_bounds = array<i64: 152, 8>}, {pipeline_mode = #tpu.pipeline_mode<synchronous>, transform_indices = @transform_1, window_bounds = array<i64: 8, 128>}, {pipeline_mode = #tpu.pipeline_mode<synchronous>, transform_indices = @transform_2, window_bounds = array<i64: 1, 128>}, {pipeline_mode = #tpu.pipeline_mode<synchronous>, transform_indices = @transform_3, window_bounds = array<i64: 128, 128>}, {pipeline_mode = #tpu.pipeline_mode<synchronous>, transform_indices = @transform_4, window_bounds = array<i64: 1, 128>}, {transform_indices = @transform_5, window_bounds = array<i64: 152, 128>}]} {
    %c0 = arith.constant 0 : index
    %c0_0 = arith.constant 0 : index
    %0 = vector.load %arg1[%c0, %c0_0] : memref<152x8xf32, #tpu.memory_space<vmem>>, vector<152x8xf32>
    %c0_1 = arith.constant 0 : index
    %c0_2 = arith.constant 0 : index
    %1 = vector.load %arg2[%c0_1, %c0_2] : memref<8x128xf32, #tpu.memory_space<vmem>>, vector<8x128xf32>
    %cst = arith.constant dense<0.000000e+00> : vector<152x128xf32>
    %2 = tpu.matmul %0, %1, %cst {dimension_numbers = #tpu.dot_dimension_numbers<[1], [0], [0], [1], [0, 0, 1, 1], [], []>} : vector<152x8xf32>, vector<8x128xf32>, vector<152x128xf32> -> vector<152x128xf32>
    %c0_3 = arith.constant 0 : index
    %c0_4 = arith.constant 0 : index
    %3 = vector.load %arg3[%c0_3, %c0_4] : memref<1x128xf32, #tpu.memory_space<vmem>>, vector<1x128xf32>
    %4 = vector.broadcast %3 : vector<1x128xf32> to vector<152x128xf32>
    %5 = arith.addf %2, %4 : vector<152x128xf32>
    %6 = arith.negf %5 : vector<152x128xf32>
    %7 = math.exp %6 : vector<152x128xf32>
    %cst_5 = arith.constant 1.000000e+00 : f32
    %8 = vector.broadcast %cst_5 : f32 to vector<152x128xf32>
    %9 = arith.addf %8, %7 : vector<152x128xf32>
    %10 = arith.divf %8, %9 : vector<152x128xf32>
    %c0_6 = arith.constant 0 : index
    %c0_7 = arith.constant 0 : index
    %11 = vector.load %arg4[%c0_6, %c0_7] : memref<128x128xf32, #tpu.memory_space<vmem>>, vector<128x128xf32>
    %cst_8 = arith.constant dense<0.000000e+00> : vector<152x128xf32>
    %12 = tpu.matmul %10, %11, %cst_8 {dimension_numbers = #tpu.dot_dimension_numbers<[1], [0], [0], [1], [0, 0, 1, 1], [], []>} : vector<152x128xf32>, vector<128x128xf32>, vector<152x128xf32> -> vector<152x128xf32>
    %c0_9 = arith.constant 0 : index
    %c0_10 = arith.constant 0 : index
    %13 = vector.load %arg5[%c0_9, %c0_10] : memref<1x128xf32, #tpu.memory_space<vmem>>, vector<1x128xf32>
    %14 = vector.broadcast %13 : vector<1x128xf32> to vector<152x128xf32>
    %15 = arith.addf %12, %14 : vector<152x128xf32>
    %c0_11 = arith.constant 0 : index
    %c0_12 = arith.constant 0 : index
    %16 = vector.load %arg6[%c0_11, %c0_12] : memref<152x128xf32, #tpu.memory_space<vmem>>, vector<152x128xf32>
    tpu.vector_store %arg6[%c0_11, %c0_12], %15 {strides = array<i32>} : memref<152x128xf32, #tpu.memory_space<vmem>>, vector<152x128xf32>,
    return
  }
  func.func @transform_0(%arg0: i32) -> (i32, i32) {
    %c0_i32 = arith.constant 0 : i32
    %c0_i32_0 = arith.constant 0 : i32
    return %arg0, %c0_i32 : i32, i32
  }
  func.func @transform_1(%arg0: i32) -> (i32, i32) {
    %c0_i32 = arith.constant 0 : i32
    %c0_i32_0 = arith.constant 0 : i32
    %c0_i32_1 = arith.constant 0 : i32
    return %c0_i32, %c0_i32_0 : i32, i32
  }
  func.func @transform_2(%arg0: i32) -> (i32, i32) {
    %c0_i32 = arith.constant 0 : i32
    %c0_i32_0 = arith.constant 0 : i32
    %c0_i32_1 = arith.constant 0 : i32
    return %c0_i32, %c0_i32_0 : i32, i32
  }
  func.func @transform_3(%arg0: i32) -> (i32, i32) {
    %c0_i32 = arith.constant 0 : i32
    %c0_i32_0 = arith.constant 0 : i32
    %c0_i32_1 = arith.constant 0 : i32
    return %c0_i32, %c0_i32_0 : i32, i32
  }
  func.func @transform_4(%arg0: i32) -> (i32, i32) {
    %c0_i32 = arith.constant 0 : i32
    %c0_i32_0 = arith.constant 0 : i32
    %c0_i32_1 = arith.constant 0 : i32
    return %c0_i32, %c0_i32_0 : i32, i32
  }
  func.func @transform_5(%arg0: i32) -> (i32, i32) {
    %c0_i32 = arith.constant 0 : i32
    %c0_i32_0 = arith.constant 0 : i32
    return %arg0, %c0_i32 : i32, i32
  }
}

</mosaic_0001>

<llo_original>
// kernel: tpu_custom_call.1
$region0: #{tpu_custom_call.1}
  #allocation0 [shape = 'u32[]', space=smem, size = 0x4, offset = 0x4, fixed_abs, tag = 'smem constant byte address 0x4 - core index']
  #allocation1 [shape = 'u32[144,128]{1,0:T(1,128)}', space=vmem, size = 0x12000, scoped, tag = 'internal scratch']
  %s0 = inlined_call_operand.vmem [shape: f32[304,8], index: 0, kind: input, shape index: {}]
  %s1 = inlined_call_operand.vmem [shape: f32[8,128], index: 1, kind: input, shape index: {}]
  %s2 = inlined_call_operand.vmem [shape: f32[1,128], index: 2, kind: input, shape index: {}]
  %s3 = inlined_call_operand.vmem [shape: f32[128,128], index: 3, kind: input, shape index: {}]
  %s4 = inlined_call_operand.vmem [shape: f32[1,128], index: 4, kind: input, shape index: {}]
  %s5 = inlined_call_operand.hbm [shape: f32[304,128], index: 5, kind: output, shape index: {}]
  %s6 = sld [smem:[#allocation0]]
  $region53: #{tpu_custom_call.1} parent=0
    _
  %s8 = ssub.s32 1, %s6
  %s9 = scalar_select 0, %s8, %s6
  $region1: #{tpu_custom_call.1} parent=0
    #allocation2 [shape = 'u8[155648]{0}', space=vmem, size = 0x26000, scoped, tag = 'output window, operand 0']
    #allocation3 [shape = 's32[2]{0}', space=sflag, size = 0x8, scoped, tag = 'scoped memory for tpu_custom_call.1']
    %10 = vsyncpa [#allocation3], 0
    %s11 = scalar_lea.sflag [#allocation3], 1
    %12 = vsyncpa %s11, 0
    loop: start=0, step=1, limit=4
    $region2: #{tpu_custom_call.1} parent=1 // loop_pre_header
      _
    $region3: #{tpu_custom_call.1} parent=1 // loop_header
      %s14 = sphi 0, %s18
      %p15 = scmp.ge.s32.totalorder %s14, 4
      %s24 = sphi 0, %s26
      %s27 = sphi 0, %s24
      %s28 = sphi 0, %s27
      %s44 = sphi 0, %s28
      %s48 = sphi 0, %s48
      %s50 = sphi 0, %s48
      %s51 = sphi 0, %s50
      %s65 = sphi 0, %s51
      %s69 = sphi 0, %s69
      %s71 = sphi 0, %s69
      %s72 = sphi 0, %s71
      %s86 = sphi 0, %s72
      %s90 = sphi 0, %s90
      %s92 = sphi 0, %s90
      %s93 = sphi 0, %s92
      %s107 = sphi 0, %s93
      %s111 = sphi 0, %s111
      %s113 = sphi 0, %s111
      %s114 = sphi 0, %s113
      %s128 = sphi 0, %s114
      %s134 = sphi 0, %s136
      %s137 = sphi 0, %s134
      %s138 = sphi 0, %s137
      %s154 = sphi 0, %s138
    $region4: #{tpu_custom_call.1} parent=1 // loop_header_branch
      %17 = sbr.rel (%p15) target = $region8
    $region5: #{tpu_custom_call.1} parent=1 // loop_body
      %s19 = ssub.s32 %s14, 1
      %s20 = ssub.s32 %s14, 2
      %s21 = sadd.s32 %s14, 1
      %s22 = ssub.s32 %s14, %s21
      %p23 = scmp.eq.s32.totalorder %s22, 0
      %s25 = sadd.s32 %s24, 1
      %s26 = scalar_select %p23, %s24, %s25
      %p29 = pneg %p23
      %p30 = scmp.eq.s32.totalorder %s14, 1
      %p31 = por %p29, %p30
      %p32 = scmp.ne.s32.totalorder %s24, %s27
      %p33 = scmp.eq.s32.totalorder %s14, 0
      %p34 = por %p32, %p33
      %p35 = scmp.ne.s32.totalorder %s24, %s27
      %p36 = scmp.eq.s32.totalorder %s19, 1
      %p37 = por %p35, %p36
      %p38 = scmp.ne.s32.totalorder %s27, %s28
      %p39 = scmp.eq.s32.totalorder %s19, 0
      %p40 = por %p38, %p39
      %p41 = scmp.ne.s32.totalorder %s27, %s28
      %p42 = scmp.eq.s32.totalorder %s20, 1
      %p43 = por %p41, %p42
      %p45 = scmp.ne.s32.totalorder %s28, %s44
      %p46 = scmp.eq.s32.totalorder %s20, 0
      %p47 = por %p45, %p46
      %s49 = sadd.s32 %s48, 1
      %p52 = scmp.eq.s32.totalorder %s14, 1
      %p53 = scmp.ne.s32.totalorder %s48, %s50
      %p54 = scmp.eq.s32.totalorder %s14, 0
      %p55 = por %p53, %p54
      %p56 = scmp.ne.s32.totalorder %s48, %s50
      %p57 = scmp.eq.s32.totalorder %s19, 1
      %p58 = por %p56, %p57
      %p59 = scmp.ne.s32.totalorder %s50, %s51
      %p60 = scmp.eq.s32.totalorder %s19, 0
      %p61 = por %p59, %p60
      %p62 = scmp.ne.s32.totalorder %s50, %s51
      %p63 = scmp.eq.s32.totalorder %s20, 1
      %p64 = por %p62, %p63
      %p66 = scmp.ne.s32.totalorder %s51, %s65
      %p67 = scmp.eq.s32.totalorder %s20, 0
      %p68 = por %p66, %p67
      %s70 = sadd.s32 %s69, 1
      %p73 = scmp.eq.s32.totalorder %s14, 1
      %p74 = scmp.ne.s32.totalorder %s69, %s71
      %p75 = scmp.eq.s32.totalorder %s14, 0
      %p76 = por %p74, %p75
      %p77 = scmp.ne.s32.totalorder %s69, %s71
      %p78 = scmp.eq.s32.totalorder %s19, 1
      %p79 = por %p77, %p78
      %p80 = scmp.ne.s32.totalorder %s71, %s72
      %p81 = scmp.eq.s32.totalorder %s19, 0
      %p82 = por %p80, %p81
      %p83 = scmp.ne.s32.totalorder %s71, %s72
      %p84 = scmp.eq.s32.totalorder %s20, 1
      %p85 = por %p83, %p84
      %p87 = scmp.ne.s32.totalorder %s72, %s86
      %p88 = scmp.eq.s32.totalorder %s20, 0
      %p89 = por %p87, %p88
      %s91 = sadd.s32 %s90, 1
      %p94 = scmp.eq.s32.totalorder %s14, 1
      %p95 = scmp.ne.s32.totalorder %s90, %s92
      %p96 = scmp.eq.s32.totalorder %s14, 0
      %p97 = por %p95, %p96
      %p98 = scmp.ne.s32.totalorder %s90, %s92
      %p99 = scmp.eq.s32.totalorder %s19, 1
      %p100 = por %p98, %p99
      %p101 = scmp.ne.s32.totalorder %s92, %s93
      %p102 = scmp.eq.s32.totalorder %s19, 0
      %p103 = por %p101, %p102
      %p104 = scmp.ne.s32.totalorder %s92, %s93
      %p105 = scmp.eq.s32.totalorder %s20, 1
      %p106 = por %p104, %p105
      %p108 = scmp.ne.s32.totalorder %s93, %s107
      %p109 = scmp.eq.s32.totalorder %s20, 0
      %p110 = por %p108, %p109
      %s112 = sadd.s32 %s111, 1
      %p115 = scmp.eq.s32.totalorder %s14, 1
      %p116 = scmp.ne.s32.totalorder %s111, %s113
      %p117 = scmp.eq.s32.totalorder %s14, 0
      %p118 = por %p116, %p117
      %p119 = scmp.ne.s32.totalorder %s111, %s113
      %p120 = scmp.eq.s32.totalorder %s19, 1
      %p121 = por %p119, %p120
      %p122 = scmp.ne.s32.totalorder %s113, %s114
      %p123 = scmp.eq.s32.totalorder %s19, 0
      %p124 = por %p122, %p123
      %p125 = scmp.ne.s32.totalorder %s113, %s114
      %p126 = scmp.eq.s32.totalorder %s20, 1
      %p127 = por %p125, %p126
      %p129 = scmp.ne.s32.totalorder %s114, %s128
      %p130 = scmp.eq.s32.totalorder %s20, 0
      %p131 = por %p129, %p130
      %s132 = ssub.s32 %s14, %s21
      %p133 = scmp.eq.s32.totalorder %s132, 0
      %s135 = sadd.s32 %s134, 1
      %s136 = scalar_select %p133, %s134, %s135
      %p139 = pneg %p133
      %p140 = scmp.eq.s32.totalorder %s14, 1
      %p141 = por %p139, %p140
      %p142 = scmp.ne.s32.totalorder %s134, %s137
      %p143 = scmp.eq.s32.totalorder %s14, 0
      %p144 = por %p142, %p143
      %p145 = scmp.ne.s32.totalorder %s134, %s137
      %p146 = scmp.eq.s32.totalorder %s19, 1
      %p147 = por %p145, %p146
      %p148 = scmp.ne.s32.totalorder %s137, %s138
      %p149 = scmp.eq.s32.totalorder %s19, 0
      %p150 = por %p148, %p149
      %p151 = scmp.ne.s32.totalorder %s137, %s138
      %p152 = scmp.eq.s32.totalorder %s20, 1
      %p153 = por %p151, %p152
      %p155 = scmp.ne.s32.totalorder %s138, %s154
      %p156 = scmp.eq.s32.totalorder %s20, 0
      %p157 = por %p155, %p156
      %p158 = scmp.le.s32.totalorder 1, %s14
      %p159 = scmp.lt.s32.totalorder %s14, 3
      %p160 = pnand %p158, %p159
      %p161 = pneg %p160
      // Predicated region
      $region9: #{tpu_custom_call.1} parent=5 // pred_check
        _
      $region10: #{tpu_custom_call.1} parent=5 // pred_check_branch
        %163 = sbr.rel (%p160) target = $region12
      $region11: #{tpu_custom_call.1} parent=5 // pred_region
        %s164 = ssub.s32 %s14, 1
        // Predicated region
        $region13: #{tpu_custom_call.1} parent=11 // pred_check
          %p165 = pneg %p61
        $region14: #{tpu_custom_call.1} parent=11 // pred_check_branch
          %167 = sbr.rel (%p165) target = $region16
        $region15: #{tpu_custom_call.1} parent=11 // pred_region
          _
        $region16: #{tpu_custom_call.1} parent=11 // pred_fallthru
          _
        // Predicated region
        $region17: #{tpu_custom_call.1} parent=11 // pred_check
          %p168 = pneg %p82
        $region18: #{tpu_custom_call.1} parent=11 // pred_check_branch
          %170 = sbr.rel (%p168) target = $region20
        $region19: #{tpu_custom_call.1} parent=11 // pred_region
          _
        $region20: #{tpu_custom_call.1} parent=11 // pred_fallthru
          _
        // Predicated region
        $region21: #{tpu_custom_call.1} parent=11 // pred_check
          %p171 = pneg %p103
        $region22: #{tpu_custom_call.1} parent=11 // pred_check_branch
          %173 = sbr.rel (%p171) target = $region24
        $region23: #{tpu_custom_call.1} parent=11 // pred_region
          _
        $region24: #{tpu_custom_call.1} parent=11 // pred_fallthru
          _
        // Predicated region
        $region25: #{tpu_custom_call.1} parent=11 // pred_check
          %p174 = pneg %p124
        $region26: #{tpu_custom_call.1} parent=11 // pred_check_branch
          %176 = sbr.rel (%p174) target = $region28
        $region27: #{tpu_custom_call.1} parent=11 // pred_region
          _
        $region28: #{tpu_custom_call.1} parent=11 // pred_fallthru
          _
      $region12: #{tpu_custom_call.1} parent=5 // pred_fallthru
        _
      %p177 = scmp.lt.s32.totalorder %s14, 2
      // Predicated region
      $region29: #{tpu_custom_call.1} parent=5 // pred_check
        %p178 = pneg %p177
      $region30: #{tpu_custom_call.1} parent=5 // pred_check_branch
        %180 = sbr.rel (%p178) target = $region32
      $region31: #{tpu_custom_call.1} parent=5 // pred_region
        // Predicated region
        $region33: #{tpu_custom_call.1} parent=31 // pred_check
          %p181 = pneg %p34
        $region34: #{tpu_custom_call.1} parent=31 // pred_check_branch
          %183 = sbr.rel (%p181) target = $region36
        $region35: #{tpu_custom_call.1} parent=31 // pred_region
          %s184 = smul.u32 19, %s14
          %p185 = scmp.lt.s32.totalorder %s184, 37
          %s186 = scalar_select %p185, %s184, 37
          %s187 = smul.addr %s186, 8
          %s188 = scalar_lea.vmem %s0, %s187
          %s189 = smul.u32 19, %s14
        $region36: #{tpu_custom_call.1} parent=31 // pred_fallthru
          _
      $region32: #{tpu_custom_call.1} parent=5 // pred_fallthru
        _
      %p190 = scmp.le.s32.totalorder 1, %s14
      %p191 = scmp.lt.s32.totalorder %s14, 3
      %p192 = pnand %p190, %p191
      %p193 = pneg %p192
      // Predicated region
      $region37: #{tpu_custom_call.1} parent=5 // pred_check
        _
      $region38: #{tpu_custom_call.1} parent=5 // pred_check_branch
        %195 = sbr.rel (%p192) target = $region40
      $region39: #{tpu_custom_call.1} parent=5 // pred_region
        %s196 = ssub.s32 %s14, 1
        %s197 = smul.u32 19, %s19
        %p198 = scmp.lt.s32.totalorder %s197, 37
        %s199 = scalar_select %p198, %s197, 37
        %s200 = smul.addr %s199, 8
        %s201 = scalar_lea.vmem %s0, %s200
        %p202 = pneg %p40
        %p203 = pneg %p37
        %p204 = pneg %p61
        %p205 = pneg %p58
        %p206 = pneg %p82
        %p207 = pneg %p79
        %p208 = pneg %p103
        %p209 = pneg %p100
        %p210 = pneg %p124
        %p211 = pneg %p121
        %p212 = pneg %p150
        %p213 = pneg %p147
        %s214 = sand.u32 %s137, 1
        %s215 = scalar_lea.sflag [#allocation3], %s214
        %s216 = sand.u32 %s137, 1
        %s217 = smul.addr %s216, 152
        %s218 = scalar_lea.vmem [#allocation2], %s217
        %s219 = smul.u32 19, %s19
        %p220 = scmp.lt.s32.totalorder %s219, 37
        %s221 = scalar_select %p220, %s219, 37
        %s222 = smul.addr %s221, 8
        %s223 = scalar_lea.vmem %s0, %s222
        %s224 = smul.u32 19, %s19
        %s225 = smul.u32 19, %s19
        %v226 = vld [vmem:[%s223] sm:$0xff]
        %v227 = vld [vmem:[%s223 + $0x8] sm:$0xff]
        %v228 = vld [vmem:[%s223 + $0x10] sm:$0xff]
        %v229 = vld [vmem:[%s223 + $0x18] sm:$0xff]
        %v230 = vld [vmem:[%s223 + $0x20] sm:$0xff]
        %v231 = vld [vmem:[%s223 + $0x28] sm:$0xff]
        %v232 = vld [vmem:[%s223 + $0x30] sm:$0xff]
        %v233 = vld [vmem:[%s223 + $0x38] sm:$0xff]
        %v234 = vld [vmem:[%s223 + $0x40] sm:$0xff]
        %v235 = vld [vmem:[%s223 + $0x48] sm:$0xff]
        %v236 = vld [vmem:[%s223 + $0x50] sm:$0xff]
        %v237 = vld [vmem:[%s223 + $0x58] sm:$0xff]
        %v238 = vld [vmem:[%s223 + $0x60] sm:$0xff]
        %v239 = vld [vmem:[%s223 + $0x68] sm:$0xff]
        %v240 = vld [vmem:[%s223 + $0x70] sm:$0xff]
        %v241 = vld [vmem:[%s223 + $0x78] sm:$0xff]
        %v242 = vld [vmem:[%s223 + $0x80] sm:$0xff]
        %v243 = vld [vmem:[%s223 + $0x88] sm:$0xff]
        %v244 = vld [vmem:[%s223 + $0x90] sm:$0xff]
        %v245 = vld [vmem:[%s1] sm:$0xff]
        %v246 = vld [vmem:[%s2] sm:$0x1]
        %v248 = vlaneseq
        %v249 = vshrl.u32 %v248, 7
        %v250 = vsub.s32 0, %v249
        %v251 = vrot.slane %v246, %v250
        %vm253 = vcmask 64512
        %v255 = vsel %vm253, %v226, 0
        %v258 = vsel %vm253, %v227, 0
        %v261 = vsel %vm253, %v228, 0
        %v264 = vsel %vm253, %v229, 0
        %v267 = vsel %vm253, %v230, 0
        %v270 = vsel %vm253, %v231, 0
        %v273 = vsel %vm253, %v232, 0
        %v276 = vsel %vm253, %v233, 0
        %v279 = vsel %vm253, %v234, 0
        %v282 = vsel %vm253, %v235, 0
        %v285 = vsel %vm253, %v236, 0
        %v288 = vsel %vm253, %v237, 0
        %v291 = vsel %vm253, %v238, 0
        %v294 = vsel %vm253, %v239, 0
        %v297 = vsel %vm253, %v240, 0
        %v300 = vsel %vm253, %v241, 0
        %v303 = vsel %vm253, %v242, 0
        %v306 = vsel %vm253, %v243, 0
        %v309 = vsel %vm253, %v244, 0
        %311 = vmatprep.subr.mxu0 0.0
        %312 = vmatpush1.msra.mxu0 %v245
        %313 = vmatprep.subr.mxu0 0.0
        %314 = vmatpush1.msra.mxu0 0.0
        %315 = vmatprep.subr.mxu0 0.0
        %316 = vmatpush1.msra.mxu0 0.0
        %317 = vmatprep.subr.mxu0 0.0
        %318 = vmatpush1.msra.mxu0 0.0
        %319 = vmatprep.subr.mxu0 0.0
        %320 = vmatpush1.msra.mxu0 0.0
        %321 = vmatprep.subr.mxu0 0.0
        %322 = vmatpush1.msra.mxu0 0.0
        %323 = vmatprep.subr.mxu0 0.0
        %324 = vmatpush1.msra.mxu0 0.0
        %325 = vmatprep.subr.mxu0 0.0
        %326 = vmatpush1.msra.mxu0 0.0
        %327 = vmatprep.subr.mxu0 0.0
        %328 = vmatpush1.msra.mxu0 0.0
        %329 = vmatprep.subr.mxu0 0.0
        %330 = vmatpush1.msra.mxu0 0.0
        %331 = vmatprep.subr.mxu0 0.0
        %332 = vmatpush1.msra.mxu0 0.0
        %333 = vmatprep.subr.mxu0 0.0
        %334 = vmatpush1.msra.mxu0 0.0
        %335 = vmatprep.subr.mxu0 0.0
        %336 = vmatpush1.msra.mxu0 0.0
        %337 = vmatprep.subr.mxu0 0.0
        %338 = vmatpush1.msra.mxu0 0.0
        %339 = vmatprep.subr.mxu0 0.0
        %340 = vmatpush1.msra.mxu0 0.0
        %341 = vmatprep.subr.mxu0 0.0
        %342 = vmatpush1.msra.mxu0 0.0
        %343 = vmatprep.subr.mxu0 0.0
        %344 = vmatpush1.msra.mxu0 0.0
        %345 = vmatprep.subr.mxu0 0.0
        %346 = vmatpush1.msra.mxu0 0.0
        %347 = vmatprep.subr.mxu0 0.0
        %348 = vmatpush1.msra.mxu0 0.0
        %349 = vmatprep.subr.mxu0 0.0
        %350 = vmatpush1.msra.mxu0 0.0
        %351 = vmatprep.subr.mxu0 0.0
        %352 = vmatpush1.msra.mxu0 0.0
        %353 = vmatprep.subr.mxu0 0.0
        %354 = vmatpush1.msra.mxu0 0.0
        %355 = vmatprep.subr.mxu0 0.0
        %356 = vmatpush1.msra.mxu0 0.0
        %357 = vmatprep.subr.mxu0 0.0
        %358 = vmatpush1.msra.mxu0 0.0
        %359 = vmatprep.subr.mxu0 0.0
        %360 = vmatpush1.msra.mxu0 0.0
        %361 = vmatprep.subr.mxu0 0.0
        %362 = vmatpush1.msra.mxu0 0.0
        %363 = vmatprep.subr.mxu0 0.0
        %364 = vmatpush1.msra.mxu0 0.0
        %365 = vmatprep.subr.mxu0 0.0
        %366 = vmatpush1.msra.mxu0 0.0
        %367 = vmatprep.subr.mxu0 0.0
        %368 = vmatpush1.msra.mxu0 0.0
        %369 = vmatprep.subr.mxu0 0.0
        %370 = vmatpush1.msra.mxu0 0.0
        %371 = vmatprep.subr.mxu0 0.0
        %372 = vmatpush1.msra.mxu0 0.0
        %373 = vmatprep.subr.mxu0 0.0
        %374 = vmatpush1.msra.mxu0 0.0
        %375 = vmatprep.mubr.f32.mxu0 0.0
        %376 = vmatmul.mubr.f32.gmra.mrb[0].mxu0 %v255
        %v377 = vpop.f32.mrb[0].mxu0
        %v378 = vadd.f32 %v251, %v377
        %v379 = vpop.f32.mrb[0].mxu0
        %380 = vmatprep.mubr.f32.mxu0 0.0
        %381 = vmatmul.mubr.f32.gmra.mrb[0].mxu0 %v258
        %v382 = vpop.f32.mrb[0].mxu0
        %v383 = vadd.f32 %v251, %v382
        %v384 = vpop.f32.mrb[0].mxu0
        %385 = vmatprep.mubr.f32.mxu0 0.0
        %386 = vmatmul.mubr.f32.gmra.mrb[0].mxu0 %v261
        %v387 = vpop.f32.mrb[0].mxu0
        %v388 = vadd.f32 %v251, %v387
        %v389 = vpop.f32.mrb[0].mxu0
        %390 = vmatprep.mubr.f32.mxu0 0.0
        %391 = vmatmul.mubr.f32.gmra.mrb[0].mxu0 %v264
        %v392 = vpop.f32.mrb[0].mxu0
        %v393 = vadd.f32 %v251, %v392
        %v394 = vpop.f32.mrb[0].mxu0
        %395 = vmatprep.mubr.f32.mxu0 0.0
        %396 = vmatmul.mubr.f32.gmra.mrb[0].mxu0 %v267
        %v397 = vpop.f32.mrb[0].mxu0
        %v398 = vadd.f32 %v251, %v397
        %v399 = vpop.f32.mrb[0].mxu0
        %400 = vmatprep.mubr.f32.mxu0 0.0
        %401 = vmatmul.mubr.f32.gmra.mrb[0].mxu0 %v270
        %v402 = vpop.f32.mrb[0].mxu0
        %v403 = vadd.f32 %v251, %v402
        %v404 = vpop.f32.mrb[0].mxu0
        %405 = vmatprep.mubr.f32.mxu0 0.0
        %406 = vmatmul.mubr.f32.gmra.mrb[0].mxu0 %v273
        %v407 = vpop.f32.mrb[0].mxu0
        %v408 = vadd.f32 %v251, %v407
        %v409 = vpop.f32.mrb[0].mxu0
        %410 = vmatprep.mubr.f32.mxu0 0.0
        %411 = vmatmul.mubr.f32.gmra.mrb[0].mxu0 %v276
        %v412 = vpop.f32.mrb[0].mxu0
        %v413 = vadd.f32 %v251, %v412
        %v414 = vpop.f32.mrb[0].mxu0
        %415 = vmatprep.mubr.f32.mxu0 0.0
        %416 = vmatmul.mubr.f32.gmra.mrb[0].mxu0 %v279
        %v417 = vpop.f32.mrb[0].mxu0
        %v418 = vadd.f32 %v251, %v417
        %v419 = vpop.f32.mrb[0].mxu0
        %420 = vmatprep.mubr.f32.mxu0 0.0
        %421 = vmatmul.mubr.f32.gmra.mrb[0].mxu0 %v282
        %v422 = vpop.f32.mrb[0].mxu0
        %v423 = vadd.f32 %v251, %v422
        %v424 = vpop.f32.mrb[0].mxu0
        %425 = vmatprep.mubr.f32.mxu0 0.0
        %426 = vmatmul.mubr.f32.gmra.mrb[0].mxu0 %v285
        %v427 = vpop.f32.mrb[0].mxu0
        %v428 = vadd.f32 %v251, %v427
        %v429 = vpop.f32.mrb[0].mxu0
        %430 = vmatprep.mubr.f32.mxu0 0.0
        %431 = vmatmul.mubr.f32.gmra.mrb[0].mxu0 %v288
        %v432 = vpop.f32.mrb[0].mxu0
        %v433 = vadd.f32 %v251, %v432
        %v434 = vpop.f32.mrb[0].mxu0
        %435 = vmatprep.mubr.f32.mxu0 0.0
        %436 = vmatmul.mubr.f32.gmra.mrb[0].mxu0 %v291
        %v437 = vpop.f32.mrb[0].mxu0
        %v438 = vadd.f32 %v251, %v437
        %v439 = vpop.f32.mrb[0].mxu0
        %440 = vmatprep.mubr.f32.mxu0 0.0
        %441 = vmatmul.mubr.f32.gmra.mrb[0].mxu0 %v294
        %v442 = vpop.f32.mrb[0].mxu0
        %v443 = vadd.f32 %v251, %v442
        %v444 = vpop.f32.mrb[0].mxu0
        %445 = vmatprep.mubr.f32.mxu0 0.0
        %446 = vmatmul.mubr.f32.gmra.mrb[0].mxu0 %v297
        %v447 = vpop.f32.mrb[0].mxu0
        %v448 = vadd.f32 %v251, %v447
        %v449 = vpop.f32.mrb[0].mxu0
        %450 = vmatprep.mubr.f32.mxu0 0.0
        %451 = vmatmul.mubr.f32.gmra.mrb[0].mxu0 %v300
        %v452 = vpop.f32.mrb[0].mxu0
        %v453 = vadd.f32 %v251, %v452
        %v454 = vpop.f32.mrb[0].mxu0
        %455 = vmatprep.mubr.f32.mxu0 0.0
        %456 = vmatmul.mubr.f32.gmra.mrb[0].mxu0 %v303
        %v457 = vpop.f32.mrb[0].mxu0
        %v458 = vadd.f32 %v251, %v457
        %v459 = vpop.f32.mrb[0].mxu0
        %460 = vmatprep.mubr.f32.mxu0 0.0
        %461 = vmatmul.mubr.f32.gmra.mrb[0].mxu0 %v306
        %v462 = vpop.f32.mrb[0].mxu0
        %v463 = vadd.f32 %v251, %v462
        %v464 = vpop.f32.mrb[0].mxu0
        %465 = vmatprep.mubr.f32.mxu0 0.0
        %466 = vmatmul.mubr.f32.gmra.mrb[0].mxu0 %v309
        %v467 = vpop.f32.mrb[0].mxu0
        %v468 = vadd.f32 %v251, %v467
        %v469 = vpop.f32.mrb[0].mxu0
        %470 = vdwg.mxu0
        %v471 = vxor.u32 %v378, 2147483648
        %v472 = vxor.u32 %v383, 2147483648
        %v473 = vxor.u32 %v388, 2147483648
        %v474 = vxor.u32 %v393, 2147483648
        %v475 = vxor.u32 %v398, 2147483648
        %v476 = vxor.u32 %v403, 2147483648
        %v477 = vxor.u32 %v408, 2147483648
        %v478 = vxor.u32 %v413, 2147483648
        %v479 = vxor.u32 %v418, 2147483648
        %v480 = vxor.u32 %v423, 2147483648
        %v481 = vxor.u32 %v428, 2147483648
        %v482 = vxor.u32 %v433, 2147483648
        %v483 = vxor.u32 %v438, 2147483648
        %v484 = vxor.u32 %v443, 2147483648
        %v485 = vxor.u32 %v448, 2147483648
        %v486 = vxor.u32 %v453, 2147483648
        %v487 = vxor.u32 %v458, 2147483648
        %v488 = vxor.u32 %v463, 2147483648
        %v489 = vxor.u32 %v468, 2147483648
        %v490 = vmul.f32 %v471, 1.442695
        %v491 = vpow.pop %v490
        %v492 = vmul.f32 %v472, 1.442695
        %v493 = vpow.pop %v492
        %v494 = vmul.f32 %v473, 1.442695
        %v495 = vpow.pop %v494
        %v496 = vmul.f32 %v474, 1.442695
        %v497 = vpow.pop %v496
        %v498 = vmul.f32 %v475, 1.442695
        %v499 = vpow.pop %v498
        %v500 = vmul.f32 %v476, 1.442695
        %v501 = vpow.pop %v500
        %v502 = vmul.f32 %v477, 1.442695
        %v503 = vpow.pop %v502
        %v504 = vmul.f32 %v478, 1.442695
        %v505 = vpow.pop %v504
        %v506 = vmul.f32 %v479, 1.442695
        %v507 = vpow.pop %v506
        %v508 = vmul.f32 %v480, 1.442695
        %v509 = vpow.pop %v508
        %v510 = vmul.f32 %v481, 1.442695
        %v511 = vpow.pop %v510
        %v512 = vmul.f32 %v482, 1.442695
        %v513 = vpow.pop %v512
        %v514 = vmul.f32 %v483, 1.442695
        %v515 = vpow.pop %v514
        %v516 = vmul.f32 %v484, 1.442695
        %v517 = vpow.pop %v516
        %v518 = vmul.f32 %v485, 1.442695
        %v519 = vpow.pop %v518
        %v520 = vmul.f32 %v486, 1.442695
        %v521 = vpow.pop %v520
        %v522 = vmul.f32 %v487, 1.442695
        %v523 = vpow.pop %v522
        %v524 = vmul.f32 %v488, 1.442695
        %v525 = vpow.pop %v524
        %v526 = vmul.f32 %v489, 1.442695
        %v527 = vpow.pop %v526
        %v528 = vadd.f32 %v491, 1.0
        %v529 = vadd.f32 %v493, 1.0
        %v530 = vadd.f32 %v495, 1.0
        %v531 = vadd.f32 %v497, 1.0
        %v532 = vadd.f32 %v499, 1.0
        %v533 = vadd.f32 %v501, 1.0
        %v534 = vadd.f32 %v503, 1.0
        %v535 = vadd.f32 %v505, 1.0
        %v536 = vadd.f32 %v507, 1.0
        %v537 = vadd.f32 %v509, 1.0
        %v538 = vadd.f32 %v511, 1.0
        %v539 = vadd.f32 %v513, 1.0
        %v540 = vadd.f32 %v515, 1.0
        %v541 = vadd.f32 %v517, 1.0
        %v542 = vadd.f32 %v519, 1.0
        %v543 = vadd.f32 %v521, 1.0
        %v544 = vadd.f32 %v523, 1.0
        %v545 = vadd.f32 %v525, 1.0
        %v546 = vadd.f32 %v527, 1.0
        %v547 = vrcp.pop %v528
        %v548 = vmul.f32 1.0, %v547
        %v549 = vrcp.pop %v529
        %v550 = vmul.f32 1.0, %v549
        %v551 = vrcp.pop %v530
        %v552 = vmul.f32 1.0, %v551
        %v553 = vrcp.pop %v531
        %v554 = vmul.f32 1.0, %v553
        %v555 = vrcp.pop %v532
        %v556 = vmul.f32 1.0, %v555
        %v557 = vrcp.pop %v533
        %v558 = vmul.f32 1.0, %v557
        %v559 = vrcp.pop %v534
        %v560 = vmul.f32 1.0, %v559
        %v561 = vrcp.pop %v535
        %v562 = vmul.f32 1.0, %v561
        %v563 = vrcp.pop %v536
        %v564 = vmul.f32 1.0, %v563
        %v565 = vrcp.pop %v537
        %v566 = vmul.f32 1.0, %v565
        %v567 = vrcp.pop %v538
        %v568 = vmul.f32 1.0, %v567
        %v569 = vrcp.pop %v539
        %v570 = vmul.f32 1.0, %v569
        %v571 = vrcp.pop %v540
        %v572 = vmul.f32 1.0, %v571
        %v573 = vrcp.pop %v541
        %v574 = vmul.f32 1.0, %v573
        %v575 = vrcp.pop %v542
        %v576 = vmul.f32 1.0, %v575
        %v577 = vrcp.pop %v543
        %v578 = vmul.f32 1.0, %v577
        %v579 = vrcp.pop %v544
        %v580 = vmul.f32 1.0, %v579
        %v581 = vrcp.pop %v545
        %v582 = vmul.f32 1.0, %v581
        %v583 = vrcp.pop %v546
        %v584 = vmul.f32 1.0, %v583
        %v585 = vld [vmem:[%s3] sm:$0xff]
        %v586 = vld [vmem:[%s3 + $0x8] sm:$0xff]
        %v587 = vld [vmem:[%s3 + $0x10] sm:$0xff]
        %v588 = vld [vmem:[%s3 + $0x18] sm:$0xff]
        %v589 = vld [vmem:[%s3 + $0x20] sm:$0xff]
        %v590 = vld [vmem:[%s3 + $0x28] sm:$0xff]
        %v591 = vld [vmem:[%s3 + $0x30] sm:$0xff]
        %v592 = vld [vmem:[%s3 + $0x38] sm:$0xff]
        %v593 = vld [vmem:[%s3 + $0x40] sm:$0xff]
        %v594 = vld [vmem:[%s3 + $0x48] sm:$0xff]
        %v595 = vld [vmem:[%s3 + $0x50] sm:$0xff]
        %v596 = vld [vmem:[%s3 + $0x58] sm:$0xff]
        %v597 = vld [vmem:[%s3 + $0x60] sm:$0xff]
        %v598 = vld [vmem:[%s3 + $0x68] sm:$0xff]
        %v599 = vld [vmem:[%s3 + $0x70] sm:$0xff]
        %v600 = vld [vmem:[%s3 + $0x78] sm:$0xff]
        %v601 = vld [vmem:[%s4] sm:$0x1]
        %v603 = vlaneseq
        %v604 = vshrl.u32 %v603, 7
        %v605 = vsub.s32 0, %v604
        %v606 = vrot.slane %v601, %v605
        %608 = vmatprep.subr.mxu0 0.0
        %609 = vmatpush1.msra.mxu0 %v585
        %610 = vmatprep.subr.mxu0 0.0
        %611 = vmatpush1.msra.mxu0 %v586
        %612 = vmatprep.subr.mxu0 0.0
        %613 = vmatpush1.msra.mxu0 %v587
        %614 = vmatprep.subr.mxu0 0.0
        %615 = vmatpush1.msra.mxu0 %v588
        %616 = vmatprep.subr.mxu0 0.0
        %617 = vmatpush1.msra.mxu0 %v589
        %618 = vmatprep.subr.mxu0 0.0
        %619 = vmatpush1.msra.mxu0 %v590
        %620 = vmatprep.subr.mxu0 0.0
        %621 = vmatpush1.msra.mxu0 %v591
        %622 = vmatprep.subr.mxu0 0.0
        %623 = vmatpush1.msra.mxu0 %v592
        %624 = vmatprep.subr.mxu0 0.0
        %625 = vmatpush1.msra.mxu0 %v593
        %626 = vmatprep.subr.mxu0 0.0
        %627 = vmatpush1.msra.mxu0 %v594
        %628 = vmatprep.subr.mxu0 0.0
        %629 = vmatpush1.msra.mxu0 %v595
        %630 = vmatprep.subr.mxu0 0.0
        %631 = vmatpush1.msra.mxu0 %v596
        %632 = vmatprep.subr.mxu0 0.0
        %633 = vmatpush1.msra.mxu0 %v597
        %634 = vmatprep.subr.mxu0 0.0
        %635 = vmatpush1.msra.mxu0 %v598
        %636 = vmatprep.subr.mxu0 0.0
        %637 = vmatpush1.msra.mxu0 %v599
        %638 = vmatprep.subr.mxu0 0.0
        %639 = vmatpush1.msra.mxu0 %v600
        %640 = vmatprep.subr.mxu0 0.0
        %641 = vmatpush1.msra.mxu0 0.0
        %642 = vmatprep.subr.mxu0 0.0
        %643 = vmatpush1.msra.mxu0 0.0
        %644 = vmatprep.subr.mxu0 0.0
        %645 = vmatpush1.msra.mxu0 0.0
        %646 = vmatprep.subr.mxu0 0.0
        %647 = vmatpush1.msra.mxu0 0.0
        %648 = vmatprep.subr.mxu0 0.0
        %649 = vmatpush1.msra.mxu0 0.0
        %650 = vmatprep.subr.mxu0 0.0
        %651 = vmatpush1.msra.mxu0 0.0
        %652 = vmatprep.subr.mxu0 0.0
        %653 = vmatpush1.msra.mxu0 0.0
        %654 = vmatprep.subr.mxu0 0.0
        %655 = vmatpush1.msra.mxu0 0.0
        %656 = vmatprep.subr.mxu0 0.0
        %657 = vmatpush1.msra.mxu0 0.0
        %658 = vmatprep.subr.mxu0 0.0
        %659 = vmatpush1.msra.mxu0 0.0
        %660 = vmatprep.subr.mxu0 0.0
        %661 = vmatpush1.msra.mxu0 0.0
        %662 = vmatprep.subr.mxu0 0.0
        %663 = vmatpush1.msra.mxu0 0.0
        %664 = vmatprep.subr.mxu0 0.0
        %665 = vmatpush1.msra.mxu0 0.0
        %666 = vmatprep.subr.mxu0 0.0
        %667 = vmatpush1.msra.mxu0 0.0
        %668 = vmatprep.subr.mxu0 0.0
        %669 = vmatpush1.msra.mxu0 0.0
        %670 = vmatprep.subr.mxu0 0.0
        %671 = vmatpush1.msra.mxu0 0.0
        %672 = vmatprep.mubr.f32.mxu0 0.0
        %673 = vmatmul.mubr.f32.gmra.mrb[0].mxu0 %v548
        %v674 = vpop.f32.mrb[0].mxu0
        %v675 = vadd.f32 %v606, %v674
        %v676 = vpop.f32.mrb[0].mxu0
        %677 = vmatprep.mubr.f32.mxu0 0.0
        %678 = vmatmul.mubr.f32.gmra.mrb[0].mxu0 %v550
        %v679 = vpop.f32.mrb[0].mxu0
        %v680 = vadd.f32 %v606, %v679
        %v681 = vpop.f32.mrb[0].mxu0
        %682 = vmatprep.mubr.f32.mxu0 0.0
        %683 = vmatmul.mubr.f32.gmra.mrb[0].mxu0 %v552
        %v684 = vpop.f32.mrb[0].mxu0
        %v685 = vadd.f32 %v606, %v684
        %v686 = vpop.f32.mrb[0].mxu0
        %687 = vmatprep.mubr.f32.mxu0 0.0
        %688 = vmatmul.mubr.f32.gmra.mrb[0].mxu0 %v554
        %v689 = vpop.f32.mrb[0].mxu0
        %v690 = vadd.f32 %v606, %v689
        %v691 = vpop.f32.mrb[0].mxu0
        %692 = vmatprep.mubr.f32.mxu0 0.0
        %693 = vmatmul.mubr.f32.gmra.mrb[0].mxu0 %v556
        %v694 = vpop.f32.mrb[0].mxu0
        %v695 = vadd.f32 %v606, %v694
        %v696 = vpop.f32.mrb[0].mxu0
        %697 = vmatprep.mubr.f32.mxu0 0.0
        %698 = vmatmul.mubr.f32.gmra.mrb[0].mxu0 %v558
        %v699 = vpop.f32.mrb[0].mxu0
        %v700 = vadd.f32 %v606, %v699
        %v701 = vpop.f32.mrb[0].mxu0
        %702 = vmatprep.mubr.f32.mxu0 0.0
        %703 = vmatmul.mubr.f32.gmra.mrb[0].mxu0 %v560
        %v704 = vpop.f32.mrb[0].mxu0
        %v705 = vadd.f32 %v606, %v704
        %v706 = vpop.f32.mrb[0].mxu0
        %707 = vmatprep.mubr.f32.mxu0 0.0
        %708 = vmatmul.mubr.f32.gmra.mrb[0].mxu0 %v562
        %v709 = vpop.f32.mrb[0].mxu0
        %v710 = vadd.f32 %v606, %v709
        %v711 = vpop.f32.mrb[0].mxu0
        %712 = vmatprep.mubr.f32.mxu0 0.0
        %713 = vmatmul.mubr.f32.gmra.mrb[0].mxu0 %v564
        %v714 = vpop.f32.mrb[0].mxu0
        %v715 = vadd.f32 %v606, %v714
        %v716 = vpop.f32.mrb[0].mxu0
        %717 = vmatprep.mubr.f32.mxu0 0.0
        %718 = vmatmul.mubr.f32.gmra.mrb[0].mxu0 %v566
        %v719 = vpop.f32.mrb[0].mxu0
        %v720 = vadd.f32 %v606, %v719
        %v721 = vpop.f32.mrb[0].mxu0
        %722 = vmatprep.mubr.f32.mxu0 0.0
        %723 = vmatmul.mubr.f32.gmra.mrb[0].mxu0 %v568
        %v724 = vpop.f32.mrb[0].mxu0
        %v725 = vadd.f32 %v606, %v724
        %v726 = vpop.f32.mrb[0].mxu0
        %727 = vmatprep.mubr.f32.mxu0 0.0
        %728 = vmatmul.mubr.f32.gmra.mrb[0].mxu0 %v570
        %v729 = vpop.f32.mrb[0].mxu0
        %v730 = vadd.f32 %v606, %v729
        %v731 = vpop.f32.mrb[0].mxu0
        %732 = vmatprep.mubr.f32.mxu0 0.0
        %733 = vmatmul.mubr.f32.gmra.mrb[0].mxu0 %v572
        %v734 = vpop.f32.mrb[0].mxu0
        %v735 = vadd.f32 %v606, %v734
        %v736 = vpop.f32.mrb[0].mxu0
        %737 = vmatprep.mubr.f32.mxu0 0.0
        %738 = vmatmul.mubr.f32.gmra.mrb[0].mxu0 %v574
        %v739 = vpop.f32.mrb[0].mxu0
        %v740 = vadd.f32 %v606, %v739
        %v741 = vpop.f32.mrb[0].mxu0
        %742 = vmatprep.mubr.f32.mxu0 0.0
        %743 = vmatmul.mubr.f32.gmra.mrb[0].mxu0 %v576
        %v744 = vpop.f32.mrb[0].mxu0
        %v745 = vadd.f32 %v606, %v744
        %v746 = vpop.f32.mrb[0].mxu0
        %747 = vmatprep.mubr.f32.mxu0 0.0
        %748 = vmatmul.mubr.f32.gmra.mrb[0].mxu0 %v578
        %v749 = vpop.f32.mrb[0].mxu0
        %v750 = vadd.f32 %v606, %v749
        %v751 = vpop.f32.mrb[0].mxu0
        %752 = vmatprep.mubr.f32.mxu0 0.0
        %753 = vmatmul.mubr.f32.gmra.mrb[0].mxu0 %v580
        %v754 = vpop.f32.mrb[0].mxu0
        %v755 = vadd.f32 %v606, %v754
        %v756 = vpop.f32.mrb[0].mxu0
        %757 = vmatprep.mubr.f32.mxu0 0.0
        %758 = vmatmul.mubr.f32.gmra.mrb[0].mxu0 %v582
        %v759 = vpop.f32.mrb[0].mxu0
        %v760 = vadd.f32 %v606, %v759
        %v761 = vpop.f32.mrb[0].mxu0
        %762 = vmatprep.mubr.f32.mxu0 0.0
        %763 = vmatmul.mubr.f32.gmra.mrb[0].mxu0 %v584
        %v764 = vpop.f32.mrb[0].mxu0
        %v765 = vadd.f32 %v606, %v764
        %v766 = vpop.f32.mrb[0].mxu0
        %767 = vdwg.mxu0
        %768 = vst [vmem:[%s218] sm:$0xff] %v675
        %769 = vst [vmem:[%s218 + $0x8] sm:$0xff] %v680
        %770 = vst [vmem:[%s218 + $0x10] sm:$0xff] %v685
        %771 = vst [vmem:[%s218 + $0x18] sm:$0xff] %v690
        %772 = vst [vmem:[%s218 + $0x20] sm:$0xff] %v695
        %773 = vst [vmem:[%s218 + $0x28] sm:$0xff] %v700
        %774 = vst [vmem:[%s218 + $0x30] sm:$0xff] %v705
        %775 = vst [vmem:[%s218 + $0x38] sm:$0xff] %v710
        %776 = vst [vmem:[%s218 + $0x40] sm:$0xff] %v715
        %777 = vst [vmem:[%s218 + $0x48] sm:$0xff] %v720
        %778 = vst [vmem:[%s218 + $0x50] sm:$0xff] %v725
        %779 = vst [vmem:[%s218 + $0x58] sm:$0xff] %v730
        %780 = vst [vmem:[%s218 + $0x60] sm:$0xff] %v735
        %781 = vst [vmem:[%s218 + $0x68] sm:$0xff] %v740
        %782 = vst [vmem:[%s218 + $0x70] sm:$0xff] %v745
        %783 = vst [vmem:[%s218 + $0x78] sm:$0xff] %v750
        %784 = vst [vmem:[%s218 + $0x80] sm:$0xff] %v755
        %785 = vst [vmem:[%s218 + $0x88] sm:$0xff] %v760
        %786 = vst [vmem:[%s218 + $0x90] sm:$0xff] %v765
        %s787 = sand.u32 %s137, 1
        %s788 = scalar_lea.sflag [#allocation3], %s787
        %s789 = sand.u32 %s137, 1
        %s790 = smul.addr %s789, 152
        %s791 = scalar_lea.vmem [#allocation2], %s790
        // Predicated region
        $region41: #{tpu_custom_call.1} parent=39 // pred_check
          %p792 = pneg %p147
        $region42: #{tpu_custom_call.1} parent=39 // pred_check_branch
          %794 = sbr.rel (%p792) target = $region44
        $region43: #{tpu_custom_call.1} parent=39 // pred_region
          %s795 = smul.u32 19, %s19
          %s797 = ssub.s32 2432, 2432
          %798 = vsyncadd %s788, %s797
          %s799 = smul.addr %s795, 128
          %s800 = scalar_lea.hbm %s5, %s799
          %s801 = sshll.u32 %s791, 4
          %s802 = int_to_ptr.vmem [resolvable:$true] %s801
          %807 = dma.vmem_to_hbm [thread:$0]  %s802, 2432, %s800, %s788, 128, 128, 8
        $region44: #{tpu_custom_call.1} parent=39 // pred_fallthru
          _
      $region40: #{tpu_custom_call.1} parent=5 // pred_fallthru
        _
      %p808 = scmp.le.s32.totalorder 2, %s14
      // Predicated region
      $region45: #{tpu_custom_call.1} parent=5 // pred_check
        %p809 = pneg %p808
      $region46: #{tpu_custom_call.1} parent=5 // pred_check_branch
        %811 = sbr.rel (%p809) target = $region48
      $region47: #{tpu_custom_call.1} parent=5 // pred_region
        %s812 = ssub.s32 %s14, 2
        // Predicated region
        $region49: #{tpu_custom_call.1} parent=47 // pred_check
          %p813 = pneg %p153
        $region50: #{tpu_custom_call.1} parent=47 // pred_check_branch
          %815 = sbr.rel (%p813) target = $region52
        $region51: #{tpu_custom_call.1} parent=47 // pred_region
          %s816 = sand.u32 %s138, 1
          %s817 = scalar_lea.sflag [#allocation3], %s816
          %s818 = sand.u32 %s138, 1
          %s819 = smul.addr %s818, 152
          %s820 = scalar_lea.vmem [#allocation2], %s819
          %821 = dma.done %s817, 2432
        $region52: #{tpu_custom_call.1} parent=47 // pred_fallthru
          _
      $region48: #{tpu_custom_call.1} parent=5 // pred_fallthru
        _
    $region6: #{tpu_custom_call.1} parent=1 // loop_footer
      %s18 = sadd.s32 1, %s14
    $region7: #{tpu_custom_call.1} parent=1 // loop_footer_branch
      %13 = sbr.rel target = $region3
    $region8: #{tpu_custom_call.1} parent=1 // loop_exit
      _
    %822 = vsyncpa [#allocation3], 1
    %s823 = scalar_lea.sflag [#allocation3], 1
    %824 = vsyncpa %s823, 1

</llo_original>
